<compile_context>
chip_gen: v5e
topology: v5e:2x2
jax: 0.10.0
libtpu: 0.0.40
codegen_flags: <defaults>
</compile_context>

<pallas_src>
import functools

import jax
import jax.numpy as jnp
from jax.experimental import pallas as pl
from jax.experimental.pallas import tpu as pltpu


def _general_entropy_kernel(x_ref, y_ref, o_ref, *, k, q, trunc, n_valid, block_rows):
    i = pl.program_id(0)

    x = x_ref[...].astype(jnp.float32)             # [TN, C]
    y = y_ref[...]                                 # [TN, 1] int32

    # Row-wise log-softmax pieces over the class (lane) axis.
    m = jnp.max(x, axis=1, keepdims=True)          # [TN, 1]
    e = jnp.exp(x - m)                             # [TN, C]
    denom = jnp.sum(e, axis=1, keepdims=True)      # [TN, 1]

    # Gather x[n, y[n]] via compare + select + lane reduction (no dynamic gather
    # on TPU).
    col = jax.lax.broadcasted_iota(jnp.int32, x.shape, 1)
    x_y = jnp.sum(jnp.where(col == y, x, 0.0), axis=1, keepdims=True)   # [TN, 1]

    # log P and P^q without materializing the probability matrix.
    log_p = x_y - m - jnp.log(denom)               # [TN, 1]
    p = jnp.exp(log_p)                             # [TN, 1]
    p_q = jnp.exp(q * log_p)                       # [TN, 1]

    # Truncated generalized CE:  (1 - P^q)/q  if P > k  else trunc.
    loss = jnp.where(p > k, (1.0 - p_q) / q, trunc)                     # [TN, 1]

    # Mask rows past the true N.  The edge tile of a non-dividing grid reads
    # unspecified data; jnp.where (select, not multiply) keeps any NaN/Inf in
    # those rows out of the sum.
    row = i * block_rows + jax.lax.broadcasted_iota(jnp.int32, loss.shape, 0)
    loss = jnp.where(row < n_valid, loss, 0.0)

    # Per-tile partial sum of losses.
    o_ref[...] = jnp.sum(loss, axis=0, keepdims=True).reshape(1, 1, 1)


def general_entropy_loss(x, y, *, k=0.0, q=0.7, block_rows=None,
                         vmem_limit_bytes=None):
    """x: [N, C] logits (f32/bf16), y: [N] int labels -> scalar f32 loss."""
    n, c = x.shape
    trunc = (1.0 - pow(k, q)) / q

    # Row tile: target ~2.5 MiB of f32 working set per tile (input double buffer
    # plus in-kernel f32 temporaries stay under every generation's scoped-VMEM
    # default).  Lane-padded class width only affects the footprint estimate;
    # the logits themselves are never padded.
    c_lanes = ((c + 127) // 128) * 128
    if block_rows is None:
        budget_f32_elems = (5 * 1024 * 1024) // 2 // 4      # ~2.5 MiB of f32
        tn = budget_f32_elems // c_lanes
        tn = max(8, min(int(tn), 1024))
        tn = (tn // 8) * 8
    else:
        tn = int(block_rows)
        assert tn % 8 == 0, "block_rows must be a multiple of 8"

    if tn >= n:
        tn = n                      # single block; block dim == full array dim
    num_tiles = pl.cdiv(n, tn)

    y2 = y.astype(jnp.int32).reshape(n, 1)

    kernel = functools.partial(
        _general_entropy_kernel,
        k=float(k), q=float(q), trunc=float(trunc),
        n_valid=n, block_rows=tn)

    partial_sums = pl.pallas_call(
        kernel,
        out_shape=jax.ShapeDtypeStruct((num_tiles, 1, 1), jnp.float32),
        grid_spec=pltpu.PrefetchScalarGridSpec(
            num_scalar_prefetch=0,
            grid=(num_tiles,),
            in_specs=[
                pl.BlockSpec((tn, c), lambda i: (i, 0)),
                pl.BlockSpec((tn, 1), lambda i: (i, 0)),
            ],
            out_specs=pl.BlockSpec((1, 1, 1), lambda i: (i, 0, 0)),
        ),
        compiler_params=pltpu.CompilerParams(
            # Independent per-tile partial sums -> fully parallel row axis
            # (sharded across both TensorCores on v7x, harmless on v5e/v6e).
            dimension_semantics=("parallel",),
            vmem_limit_bytes=vmem_limit_bytes,
        ),
    )(x, y2)

    return jnp.sum(partial_sums) / n


def _reference(x, y, k, q):
    prob = jax.nn.softmax(x.astype(jnp.float32), axis=1)
    P = jnp.take_along_axis(prob, y[:, None].astype(jnp.int32), axis=1)
    trunc = (1.0 - pow(k, q)) / q
    mask = (P <= k).astype(jnp.float32)
    loss = (1.0 - jnp.power(P, q)) / q * (1.0 - mask) + trunc * mask
    return jnp.mean(loss)


if __name__ == "__main__":
    key = jax.random.PRNGKey(0)
    k1, k2, k3, k4, k5, k6 = jax.random.split(key, 6)

    # Case 1: ragged shapes (C < 128, N not a multiple of the tile) -> exercises
    # the non-128 class extent, the padded edge tile, and row masking.
    n1, c1 = 13, 40
    x1 = jax.random.normal(k1, (n1, c1), dtype=jnp.float32) * 3.0
    y1 = jax.random.randint(k2, (n1,), 0, c1, dtype=jnp.int32)
    out1 = jax.block_until_ready(
        general_entropy_loss(x1, y1, k=0.0, q=0.7, block_rows=8))
    ref1 = _reference(x1, y1, 0.0, 0.7)
    assert jnp.allclose(out1, ref1, rtol=1e-4, atol=1e-5), (out1, ref1)

    # Case 2: lane-aligned classes, nonzero truncation threshold, auto tiling
    # (single full-extent row block).
    n2, c2 = 16, 256
    x2 = jax.random.normal(k3, (n2, c2), dtype=jnp.float32) * 2.0
    y2 = jax.random.randint(k4, (n2,), 0, c2, dtype=jnp.int32)
    out2 = jax.block_until_ready(general_entropy_loss(x2, y2, k=0.3, q=0.5))
    ref2 = _reference(x2, y2, 0.3, 0.5)
    assert jnp.allclose(out2, ref2, rtol=1e-4, atol=1e-5), (out2, ref2)

    # Case 3: bf16 logits, C > 128 but not a multiple of 128, multi-tile grid.
    n3, c3 = 24, 160
    x3 = (jax.random.normal(k5, (n3, c3), dtype=jnp.float32) * 2.5).astype(jnp.bfloat16)
    y3 = jax.random.randint(k6, (n3,), 0, c3, dtype=jnp.int32)
    out3 = jax.block_until_ready(
        general_entropy_loss(x3, y3, k=0.0, q=0.7, block_rows=8))
    ref3 = _reference(x3, y3, 0.0, 0.7)
    assert jnp.allclose(out3, ref3, rtol=5e-4, atol=1e-4), (out3, ref3)

    print("KERNEL_OK")
</pallas_src>

<mosaic_0001>
module attributes {stable_mosaic.version = 11 : i64} {
  func.func @_general_entropy_kernel(%arg0: i32, %arg1: memref<8x40xf32, #tpu.memory_space<vmem>>, %arg2: memref<8x1xi32, #tpu.memory_space<vmem>>, %arg3: memref<1x1x1xf32, #tpu.memory_space<vmem>>) attributes {dimension_semantics = [#tpu.dimension_semantics<parallel>], iteration_bounds = array<i64: 2>, scalar_prefetch = 0 : i64, scratch_operands = 0 : i64, tpu.core_type = #tpu.core_type<tc>, window_params = [{transform_indices = @transform_0, window_bounds = array<i64: 8, 40>}, {transform_indices = @transform_1, window_bounds = array<i64: 8, 1>}, {transform_indices = @transform_2, window_bounds = array<i64: 1, 1, 1>}]} {
    %c0 = arith.constant 0 : index
    %c0_0 = arith.constant 0 : index
    %0 = vector.load %arg1[%c0, %c0_0] : memref<8x40xf32, #tpu.memory_space<vmem>>, vector<8x40xf32>
    %c0_1 = arith.constant 0 : index
    %c0_2 = arith.constant 0 : index
    %1 = vector.load %arg2[%c0_1, %c0_2] : memref<8x1xi32, #tpu.memory_space<vmem>>, vector<8x1xi32>
    %cst = arith.constant dense<0xFF800000> : vector<8xf32>
    %2 = vector.multi_reduction <maximumf>, %0, %cst [1] : vector<8x40xf32> to vector<8xf32>
    %3 = vector.shape_cast %2 : vector<8xf32> to vector<8x1xf32>
    %4 = vector.broadcast %3 : vector<8x1xf32> to vector<8x40xf32>
    %5 = arith.subf %0, %4 : vector<8x40xf32>
    %6 = math.exp %5 : vector<8x40xf32>
    %cst_3 = arith.constant dense<0.000000e+00> : vector<8xf32>
    %7 = vector.multi_reduction <add>, %6, %cst_3 [1] : vector<8x40xf32> to vector<8xf32>
    %8 = vector.shape_cast %7 : vector<8xf32> to vector<8x1xf32>
    %9 = tpu.iota {dimensions = array<i32: 1>} : vector<8x40xi32>
    %10 = vector.broadcast %1 : vector<8x1xi32> to vector<8x40xi32>
    %11 = arith.cmpi eq, %9, %10 : vector<8x40xi32>
    %cst_4 = arith.constant 0.000000e+00 : f32
    %12 = vector.broadcast %cst_4 : f32 to vector<8x40xf32>
    %13 = arith.select %11, %0, %12 : vector<8x40xi1>, vector<8x40xf32>
    %cst_5 = arith.constant dense<0.000000e+00> : vector<8xf32>
    %14 = vector.multi_reduction <add>, %13, %cst_5 [1] : vector<8x40xf32> to vector<8xf32>
    %15 = vector.shape_cast %14 : vector<8xf32> to vector<8x1xf32>
    %16 = arith.subf %15, %3 : vector<8x1xf32>
    %17 = math.log %8 : vector<8x1xf32>
    %18 = arith.subf %16, %17 : vector<8x1xf32>
    %19 = math.exp %18 : vector<8x1xf32>
    %cst_6 = arith.constant 0.699999988 : f32
    %20 = vector.broadcast %cst_6 : f32 to vector<8x1xf32>
    %21 = arith.mulf %20, %18 : vector<8x1xf32>
    %22 = math.exp %21 : vector<8x1xf32>
    %cst_7 = arith.constant 0.000000e+00 : f32
    %23 = vector.broadcast %cst_7 : f32 to vector<8x1xf32>
    %24 = arith.cmpf ogt, %19, %23 : vector<8x1xf32>
    %cst_8 = arith.constant 1.000000e+00 : f32
    %25 = vector.broadcast %cst_8 : f32 to vector<8x1xf32>
    %26 = arith.subf %25, %22 : vector<8x1xf32>
    %cst_9 = arith.constant 0.699999988 : f32
    %27 = vector.broadcast %cst_9 : f32 to vector<8x1xf32>
    %28 = arith.divf %26, %27 : vector<8x1xf32>
    %cst_10 = arith.constant 1.42857146 : f32
    %29 = vector.broadcast %cst_10 : f32 to vector<8x1xf32>
    %30 = arith.select %24, %28, %29 : vector<8x1xi1>, vector<8x1xf32>
    %c8_i32 = arith.constant 8 : i32
    %31 = arith.muli %arg0, %c8_i32 : i32
    %32 = tpu.iota {dimensions = array<i32: 0>} : vector<8x1xi32>
    %33 = vector.broadcast %31 : i32 to vector<8x1xi32>
    %34 = arith.addi %33, %32 : vector<8x1xi32>
    %c13_i32 = arith.constant 13 : i32
    %35 = vector.broadcast %c13_i32 : i32 to vector<8x1xi32>
    %36 = arith.cmpi slt, %34, %35 : vector<8x1xi32>
    %cst_11 = arith.constant 0.000000e+00 : f32
    %37 = vector.broadcast %cst_11 : f32 to vector<8x1xf32>
    %38 = arith.select %36, %30, %37 : vector<8x1xi1>, vector<8x1xf32>
    %cst_12 = arith.constant dense<0.000000e+00> : vector<1xf32>
    %39 = vector.multi_reduction <add>, %38, %cst_12 [0] : vector<8x1xf32> to vector<1xf32>
    %40 = vector.shape_cast %39 : vector<1xf32> to vector<1x1xf32>
    %41 = vector.shape_cast %40 : vector<1x1xf32> to vector<1x1x1xf32>
    %c0_13 = arith.constant 0 : index
    %c0_14 = arith.constant 0 : index
    %c0_15 = arith.constant 0 : index
    %42 = vector.load %arg3[%c0_13, %c0_14, %c0_15] : memref<1x1x1xf32, #tpu.memory_space<vmem>>, vector<1x1x1xf32>
    tpu.vector_store %arg3[%c0_13, %c0_14, %c0_15], %41 {strides = array<i32>} : memref<1x1x1xf32, #tpu.memory_space<vmem>>, vector<1x1x1xf32>,
    return
  }
  func.func @transform_0(%arg0: i32) -> (i32, i32) {
    %c0_i32 = arith.constant 0 : i32
    %c0_i32_0 = arith.constant 0 : i32
    return %arg0, %c0_i32 : i32, i32
  }
  func.func @transform_1(%arg0: i32) -> (i32, i32) {
    %c0_i32 = arith.constant 0 : i32
    %c0_i32_0 = arith.constant 0 : i32
    return %arg0, %c0_i32 : i32, i32
  }
  func.func @transform_2(%arg0: i32) -> (i32, i32, i32) {
    %c0_i32 = arith.constant 0 : i32
    %c0_i32_0 = arith.constant 0 : i32
    %c0_i32_1 = arith.constant 0 : i32
    return %arg0, %c0_i32, %c0_i32_0 : i32, i32, i32
  }
}

</mosaic_0001>

<llo_original>
// kernel: tpu_custom_call.1
$region0: #{tpu_custom_call.1}
  #allocation0 [shape = 'u32[]', space=smem, size = 0x4, offset = 0x4, fixed_abs, tag = 'smem constant byte address 0x4 - core index']
  #allocation1 [shape = 'u32[72,128]{1,0:T(1,128)}', space=vmem, size = 0x9000, scoped, tag = 'internal scratch']
  %s0 = inlined_call_operand.vmem [shape: f32[13,40], index: 0, kind: input, shape index: {}]
  %s1 = inlined_call_operand.vmem [shape: s32[13,1], index: 1, kind: input, shape index: {}]
  %s2 = inlined_call_operand.vmem [shape: f32[2,1,1], index: 2, kind: output, shape index: {}]
  %s3 = sld [smem:[#allocation0]]
  $region41: #{tpu_custom_call.1} parent=0
    _
  %s5 = ssub.s32 1, %s3
  %s6 = scalar_select 0, %s5, %s3
  loop: start=0, step=1, limit=4
  $region2: #{tpu_custom_call.1} parent=0 // loop_pre_header
    _
  $region3: #{tpu_custom_call.1} parent=0 // loop_header
    %s8 = sphi 0, %s12
    %p9 = scmp.ge.s32.totalorder %s8, 4
    %s18 = sphi 0, %s20
    %s21 = sphi 0, %s18
    %s22 = sphi 0, %s21
    %s38 = sphi 0, %s22
    %s44 = sphi 0, %s46
    %s47 = sphi 0, %s44
    %s48 = sphi 0, %s47
    %s64 = sphi 0, %s48
    %s70 = sphi 0, %s72
    %s73 = sphi 0, %s70
    %s74 = sphi 0, %s73
    %s90 = sphi 0, %s74
  $region4: #{tpu_custom_call.1} parent=0 // loop_header_branch
    %11 = sbr.rel (%p9) target = $region8
  $region5: #{tpu_custom_call.1} parent=0 // loop_body
    %s13 = ssub.s32 %s8, 1
    %s14 = ssub.s32 %s8, 2
    %s15 = sadd.s32 %s8, 1
    %s16 = ssub.s32 %s8, %s15
    %p17 = scmp.eq.s32.totalorder %s16, 0
    %s19 = sadd.s32 %s18, 1
    %s20 = scalar_select %p17, %s18, %s19
    %p23 = pneg %p17
    %p24 = scmp.eq.s32.totalorder %s8, 1
    %p25 = por %p23, %p24
    %p26 = scmp.ne.s32.totalorder %s18, %s21
    %p27 = scmp.eq.s32.totalorder %s8, 0
    %p28 = por %p26, %p27
    %p29 = scmp.ne.s32.totalorder %s18, %s21
    %p30 = scmp.eq.s32.totalorder %s13, 1
    %p31 = por %p29, %p30
    %p32 = scmp.ne.s32.totalorder %s21, %s22
    %p33 = scmp.eq.s32.totalorder %s13, 0
    %p34 = por %p32, %p33
    %p35 = scmp.ne.s32.totalorder %s21, %s22
    %p36 = scmp.eq.s32.totalorder %s14, 1
    %p37 = por %p35, %p36
    %p39 = scmp.ne.s32.totalorder %s22, %s38
    %p40 = scmp.eq.s32.totalorder %s14, 0
    %p41 = por %p39, %p40
    %s42 = ssub.s32 %s8, %s15
    %p43 = scmp.eq.s32.totalorder %s42, 0
    %s45 = sadd.s32 %s44, 1
    %s46 = scalar_select %p43, %s44, %s45
    %p49 = pneg %p43
    %p50 = scmp.eq.s32.totalorder %s8, 1
    %p51 = por %p49, %p50
    %p52 = scmp.ne.s32.totalorder %s44, %s47
    %p53 = scmp.eq.s32.totalorder %s8, 0
    %p54 = por %p52, %p53
    %p55 = scmp.ne.s32.totalorder %s44, %s47
    %p56 = scmp.eq.s32.totalorder %s13, 1
    %p57 = por %p55, %p56
    %p58 = scmp.ne.s32.totalorder %s47, %s48
    %p59 = scmp.eq.s32.totalorder %s13, 0
    %p60 = por %p58, %p59
    %p61 = scmp.ne.s32.totalorder %s47, %s48
    %p62 = scmp.eq.s32.totalorder %s14, 1
    %p63 = por %p61, %p62
    %p65 = scmp.ne.s32.totalorder %s48, %s64
    %p66 = scmp.eq.s32.totalorder %s14, 0
    %p67 = por %p65, %p66
    %s68 = ssub.s32 %s8, %s15
    %p69 = scmp.eq.s32.totalorder %s68, 0
    %s71 = sadd.s32 %s70, 1
    %s72 = scalar_select %p69, %s70, %s71
    %p75 = pneg %p69
    %p76 = scmp.eq.s32.totalorder %s8, 1
    %p77 = por %p75, %p76
    %p78 = scmp.ne.s32.totalorder %s70, %s73
    %p79 = scmp.eq.s32.totalorder %s8, 0
    %p80 = por %p78, %p79
    %p81 = scmp.ne.s32.totalorder %s70, %s73
    %p82 = scmp.eq.s32.totalorder %s13, 1
    %p83 = por %p81, %p82
    %p84 = scmp.ne.s32.totalorder %s73, %s74
    %p85 = scmp.eq.s32.totalorder %s13, 0
    %p86 = por %p84, %p85
    %p87 = scmp.ne.s32.totalorder %s73, %s74
    %p88 = scmp.eq.s32.totalorder %s14, 1
    %p89 = por %p87, %p88
    %p91 = scmp.ne.s32.totalorder %s74, %s90
    %p92 = scmp.eq.s32.totalorder %s14, 0
    %p93 = por %p91, %p92
    %p94 = scmp.le.s32.totalorder 1, %s8
    %p95 = scmp.lt.s32.totalorder %s8, 3
    %p96 = pnand %p94, %p95
    %p97 = pneg %p96
    // Predicated region
    $region9: #{tpu_custom_call.1} parent=5 // pred_check
      _
    $region10: #{tpu_custom_call.1} parent=5 // pred_check_branch
      %99 = sbr.rel (%p96) target = $region12
    $region11: #{tpu_custom_call.1} parent=5 // pred_region
      %s100 = ssub.s32 %s8, 1
    $region12: #{tpu_custom_call.1} parent=5 // pred_fallthru
      _
    %p101 = scmp.lt.s32.totalorder %s8, 2
    // Predicated region
    $region13: #{tpu_custom_call.1} parent=5 // pred_check
      %p102 = pneg %p101
    $region14: #{tpu_custom_call.1} parent=5 // pred_check_branch
      %104 = sbr.rel (%p102) target = $region16
    $region15: #{tpu_custom_call.1} parent=5 // pred_region
      // Predicated region
      $region17: #{tpu_custom_call.1} parent=15 // pred_check
        %p105 = pneg %p28
      $region18: #{tpu_custom_call.1} parent=15 // pred_check_branch
        %107 = sbr.rel (%p105) target = $region20
      $region19: #{tpu_custom_call.1} parent=15 // pred_region
        %p108 = scmp.lt.s32.totalorder %s8, 1
        %s109 = scalar_select %p108, %s8, 1
        %s110 = smul.addr %s109, 8
        %s111 = scalar_lea.vmem %s0, %s110
      $region20: #{tpu_custom_call.1} parent=15 // pred_fallthru
        _
      // Predicated region
      $region21: #{tpu_custom_call.1} parent=15 // pred_check
        %p112 = pneg %p54
      $region22: #{tpu_custom_call.1} parent=15 // pred_check_branch
        %114 = sbr.rel (%p112) target = $region24
      $region23: #{tpu_custom_call.1} parent=15 // pred_region
        %p115 = scmp.lt.s32.totalorder %s8, 1
        %s116 = scalar_select %p115, %s8, 1
        %s117 = smul.addr %s116, 8
        %s118 = scalar_lea.vmem %s1, %s117
      $region24: #{tpu_custom_call.1} parent=15 // pred_fallthru
        _
    $region16: #{tpu_custom_call.1} parent=5 // pred_fallthru
      _
    %p119 = scmp.le.s32.totalorder 1, %s8
    %p120 = scmp.lt.s32.totalorder %s8, 3
    %p121 = pnand %p119, %p120
    %p122 = pneg %p121
    // Predicated region
    $region25: #{tpu_custom_call.1} parent=5 // pred_check
      _
    $region26: #{tpu_custom_call.1} parent=5 // pred_check_branch
      %124 = sbr.rel (%p121) target = $region28
    $region27: #{tpu_custom_call.1} parent=5 // pred_region
      %s125 = ssub.s32 %s8, 1
      %p126 = scmp.lt.s32.totalorder %s13, 1
      %s127 = scalar_select %p126, %s13, 1
      %s128 = smul.addr %s127, 8
      %s129 = scalar_lea.vmem %s0, %s128
      %p130 = pneg %p34
      %p131 = pneg %p31
      %p132 = scmp.lt.s32.totalorder %s13, 1
      %s133 = scalar_select %p132, %s13, 1
      %s134 = smul.addr %s133, 8
      %s135 = scalar_lea.vmem %s1, %s134
      %p136 = pneg %p60
      %p137 = pneg %p57
      %p138 = pneg %p86
      %p139 = pneg %p83
      %p140 = scmp.lt.s32.totalorder %s13, 1
      %s141 = scalar_select %p140, %s13, 1
      %s142 = scalar_lea.vmem %s2, %s141
      %p143 = scmp.lt.s32.totalorder %s13, 1
      %s144 = scalar_select %p143, %s13, 1
      %s145 = smul.addr %s144, 8
      %s146 = scalar_lea.vmem %s0, %s145
      %p147 = scmp.lt.s32.totalorder %s13, 1
      %s148 = scalar_select %p147, %s13, 1
      %s149 = smul.addr %s148, 8
      %s150 = scalar_lea.vmem %s1, %s149
      %p151 = scmp.lt.s32.totalorder %s13, 1
      %s152 = scalar_select %p151, %s13, 1
      %s153 = scalar_lea.vmem %s2, %s152
      %v154 = vld [vmem:[%s146] sm:$0xff]
      %v155 = vld [vmem:[%s150] sm:$0xff]
      %vm156 = vcmask 326656
      %v157 = vsel %vm156, %v154, -inf
      %158 = vmax.xlane.f32.xlu0 %v157
      %v159 = vpop.xlane.xlu0 %158
      %v160 = vsub.f32 %v154, %v159
      %v161 = vmul.f32 %v160, 1.442695
      %v162 = vpow.pop %v161
      %v163 = vsel %vm156, %v162, 0.0
      %164 = vadd.xlane.f32.xlu0 %v163
      %v165 = vpop.xlane.xlu0 %164
      %v166 = vlaneseq
      %v167 = vand.u32 %v166, 127
      %168 = vset.pattern.permute.xlu0 0
      %169 = vperm.xlu0 %168, %v155
      %v170 = vpop.permute.xlu0 %169
      %vm171 = vcmp.eq.s32.totalorder %v167, %v170
      %v172 = vsel %vm171, %v154, 0.0
      %v173 = vsel %vm156, %v172, 0.0
      %174 = vadd.xlane.f32.xlu0 %v173
      %v175 = vpop.xlane.xlu0 %174
      %v176 = vsub.f32 %v175, %v159
      %v177 = vlog2.pop %v165
      %v178 = vmul.f32 %v177, 0.6931472
      %v179 = vsub.f32 %v176, %v178
      %v180 = vmul.f32 %v179, 1.442695
      %v181 = vpow.pop %v180
      %v182 = vmul.f32 %v179, 0.7
      %v183 = vmul.f32 %v182, 1.442695
      %v184 = vpow.pop %v183
      %vm185 = vcmp.gt.f32.partialorder %v181, 0.0
      %v186 = vsub.f32 1.0, %v184
      %v187 = vrcp.pop 0.7
      %v188 = vmul.f32 0.7, %v187
      %v189 = vsub.f32 1.0, %v188
      %v190 = vmul.f32 %v187, %v189
      %v191 = vadd.f32 %v187, %v190
      %vm192 = vweird.f32 %v187
      %v193 = vsel %vm192, %v187, %v191
      %v194 = vmul.f32 %v186, %v193
      %v195 = vsel %vm185, %v194, 1.4285715
      %s196 = smul.u32 %s13, 8
      %v197 = vlaneseq
      %v198 = vshrl.u32 %v197, 7
      %v199 = vstv %s196
      %v200 = vadd.s32 %v199, %v198
      %vm201 = vcmp.lt.s32.totalorder %v200, 13
      %v202 = vsel %vm201, %v195, 0.0
      %v203 = vrot.slane %v202, 4
      %v204 = vadd.f32 %v202, %v203
      %v205 = vrot.slane %v204, 2
      %v206 = vadd.f32 %v204, %v205
      %v207 = vrot.slane %v206, 1
      %v208 = vadd.f32 %v206, %v207
      %vm209 = vcmask 0
      %210 = vst.msk [vmem:[%s153] sm:$0x1] %vm209, %v208
      %p211 = scmp.lt.s32.totalorder %s13, 1
      %s212 = scalar_select %p211, %s13, 1
      %s213 = scalar_lea.vmem %s2, %s212
      // Predicated region
      $region29: #{tpu_custom_call.1} parent=27 // pred_check
        %p214 = pneg %p83
      $region30: #{tpu_custom_call.1} parent=27 // pred_check_branch
        %216 = sbr.rel (%p214) target = $region32
      $region31: #{tpu_custom_call.1} parent=27 // pred_region
        _
      $region32: #{tpu_custom_call.1} parent=27 // pred_fallthru
        _
    $region28: #{tpu_custom_call.1} parent=5 // pred_fallthru
      _
    %p217 = scmp.le.s32.totalorder 2, %s8
    // Predicated region
    $region33: #{tpu_custom_call.1} parent=5 // pred_check
      %p218 = pneg %p217
    $region34: #{tpu_custom_call.1} parent=5 // pred_check_branch
      %220 = sbr.rel (%p218) target = $region36
    $region35: #{tpu_custom_call.1} parent=5 // pred_region
      %s221 = ssub.s32 %s8, 2
      // Predicated region
      $region37: #{tpu_custom_call.1} parent=35 // pred_check
        %p222 = pneg %p89
      $region38: #{tpu_custom_call.1} parent=35 // pred_check_branch
        %224 = sbr.rel (%p222) target = $region40
      $region39: #{tpu_custom_call.1} parent=35 // pred_region
        %p225 = scmp.lt.s32.totalorder %s14, 1
        %s226 = scalar_select %p225, %s14, 1
        %s227 = scalar_lea.vmem %s2, %s226
      $region40: #{tpu_custom_call.1} parent=35 // pred_fallthru
        _
    $region36: #{tpu_custom_call.1} parent=5 // pred_fallthru
      _
  $region6: #{tpu_custom_call.1} parent=0 // loop_footer
    %s12 = sadd.s32 1, %s8
  $region7: #{tpu_custom_call.1} parent=0 // loop_footer_branch
    %7 = sbr.rel target = $region3
  $region8: #{tpu_custom_call.1} parent=0 // loop_exit
    _

</llo_original>
